<compile_context>
chip_gen: v7x
topology: tpu7x:2x2x1
jax: 0.10.0
libtpu: 0.0.40
codegen_flags: <defaults>
</compile_context>

<pallas_src>
import functools

import jax
import jax.numpy as jnp
from jax.experimental import pallas as pl
from jax.experimental.pallas import tpu as pltpu

NUM_FEATURES = 9        # categorical attributes per node
NUM_ROWS = 100          # rows per embedding table
PADDED_ROWS = 128       # rows per table after zero-padding (lane/sublane align)
HIDDEN = 32             # hidden_channels


def _atom_encoder_kernel(idx_ref, emb_ref, out_ref, *, num_features, hidden):
    # idx_ref: (F, TN) int32              -- node attribute indices, lane-dense
    # emb_ref: (2H, F*128) bf16           -- [hi; lo] planes of transposed table
    # out_ref: (TN, H) float32
    tn = idx_ref.shape[1]

    # Sublane iota shared by all feature blocks: row index r in [0, 128).
    row_iota = jax.lax.broadcasted_iota(jnp.int32, (PADDED_ROWS, tn), 0)

    # Per-feature (128, TN) one-hot block: block[r, n] = (idx[f, n] == r).
    # 9 VPU compares over (128, TN), cast to exact bf16 0/1, concat on sublanes.
    blocks = []
    for f in range(num_features):                       # static unroll
        idx_row = idx_ref[f:f + 1, :]                   # (1, TN)
        blocks.append((row_iota == idx_row).astype(jnp.bfloat16))
    onehot_t = jnp.concatenate(blocks, axis=0)          # (F*128, TN) bf16

    # Single MXU contraction with TN as the (lane-dense) output width.
    res = jnp.dot(emb_ref[...], onehot_t,
                  preferred_element_type=jnp.float32)   # (2H, TN) f32
    out_t = res[:hidden, :] + res[hidden:, :]           # hi + lo -> (H, TN)

    # One in-kernel transpose so the module-facing output stays (N, H).
    out_ref[...] = out_t.T                              # (TN, H)


def _default_tile_n(n):
    # >= 2 grid steps when possible (megacore split on v7x), lane-multiple,
    # capped so intermediates fit comfortably on every generation.
    per_core = -(-n // 2)
    t = -(-per_core // 128) * 128
    return max(128, min(1024, t))


def atom_encoder(x_idx, emb_tables, *, tile_n=None):
    """x_idx: (N, F<=9) int; emb_tables: (9, 100, H) float32 -> (N, H) float32."""
    if x_idx.ndim == 1:                      # mirrors the x.unsqueeze(1) branch
        x_idx = x_idx[:, None]
    x_idx = x_idx.astype(jnp.int32)
    n, f = x_idx.shape
    assert f <= NUM_FEATURES
    h = emb_tables.shape[-1]

    # Lane-dense index layout for the kernel (contiguous DMA, and the
    # orientation the flipped contraction needs).
    x_t = x_idx.T                                            # (F, N)

    # Pad each used table (100 -> 128 rows, zeros), flatten, transpose to
    # (H, F*128) and split into bf16 hi/lo planes stacked as (2H, F*128).
    emb_p = jnp.pad(emb_tables[:f].astype(jnp.float32),
                    ((0, 0), (0, PADDED_ROWS - NUM_ROWS), (0, 0)))
    emb_t = emb_p.reshape(f * PADDED_ROWS, h).T              # (H, F*128)
    emb_hi = emb_t.astype(jnp.bfloat16)
    emb_lo = (emb_t - emb_hi.astype(jnp.float32)).astype(jnp.bfloat16)
    emb_hilo = jnp.concatenate([emb_hi, emb_lo], axis=0)     # (2H, F*128)

    if tile_n is None:
        tile_n = _default_tile_n(n)
    grid = (pl.cdiv(n, tile_n),)

    kernel = functools.partial(_atom_encoder_kernel, num_features=f, hidden=h)
    out = pl.pallas_call(
        kernel,
        out_shape=jax.ShapeDtypeStruct((n, h), jnp.float32),
        grid_spec=pltpu.PrefetchScalarGridSpec(
            num_scalar_prefetch=0,
            grid=grid,
            in_specs=[
                # (F, TN) index block: 9 == full dim (sublanes), TN lane-dense.
                pl.BlockSpec((f, tile_n), lambda i: (0, i)),
                # Resident table slab (constant index_map => DMA'd once).
                pl.BlockSpec((2 * h, f * PADDED_ROWS), lambda i: (0, 0)),
            ],
            out_specs=pl.BlockSpec((tile_n, h), lambda i: (i, 0)),
        ),
        compiler_params=pltpu.CompilerParams(
            dimension_semantics=("parallel",)),
    )(x_t, emb_hilo)
    return out


def atom_encoder_ref(x_idx, emb_tables):
    # pure-JAX reference: sum_i emb_tables[i][x_idx[:, i]]
    if x_idx.ndim == 1:
        x_idx = x_idx[:, None]
    out = jnp.zeros((x_idx.shape[0], emb_tables.shape[-1]), jnp.float32)
    for i in range(x_idx.shape[1]):
        out = out + jnp.take(emb_tables[i], x_idx[:, i], axis=0)
    return out


if __name__ == "__main__":
    key = jax.random.PRNGKey(0)
    k_idx, k_emb, k_idx2 = jax.random.split(key, 3)

    # Small, deterministic example: 8 nodes x 9 categorical features.
    N = 8
    x = jax.random.randint(k_idx, (N, NUM_FEATURES), 0, NUM_ROWS,
                           dtype=jnp.int32)

    # torch.nn.Embedding default init is N(0, 1); reproduce deterministically.
    emb = jax.random.normal(k_emb, (NUM_FEATURES, NUM_ROWS, HIDDEN),
                            dtype=jnp.float32)

    out = jax.block_until_ready(atom_encoder(x, emb))
    ref = atom_encoder_ref(x, emb)
    assert out.shape == (N, HIDDEN)
    # hi/lo bf16 table split -> <= ~2^-18 relative error per looked-up value.
    assert jnp.allclose(out, ref, atol=3e-4, rtol=3e-4)

    # Multi-tile grid with a masked boundary block (1000 = 512 + 488).
    N2 = 1000
    x2 = jax.random.randint(k_idx2, (N2, NUM_FEATURES), 0, NUM_ROWS,
                            dtype=jnp.int32)
    out2 = jax.block_until_ready(atom_encoder(x2, emb, tile_n=512))
    ref2 = atom_encoder_ref(x2, emb)
    assert out2.shape == (N2, HIDDEN)
    assert jnp.allclose(out2, ref2, atol=3e-4, rtol=3e-4)

    print("KERNEL_OK")
</pallas_src>

<mosaic_0001>
module attributes {stable_mosaic.version = 11 : i64} {
  func.func @_atom_encoder_kernel(%arg0: i32, %arg1: memref<9x128xi32, #tpu.memory_space<vmem>>, %arg2: memref<64x1152xbf16, #tpu.memory_space<vmem>>, %arg3: memref<128x32xf32, #tpu.memory_space<vmem>>) attributes {dimension_semantics = [#tpu.dimension_semantics<parallel>], iteration_bounds = array<i64: 1>, scalar_prefetch = 0 : i64, scratch_operands = 0 : i64, tpu.core_type = #tpu.core_type<tc>, window_params = [{transform_indices = @transform_0, window_bounds = array<i64: 9, 128>}, {pipeline_mode = #tpu.pipeline_mode<synchronous>, transform_indices = @transform_1, window_bounds = array<i64: 64, 1152>}, {transform_indices = @transform_2, window_bounds = array<i64: 128, 32>}]} {
    %0 = tpu.iota {dimensions = array<i32: 0>} : vector<128x128xi32>
    %c0 = arith.constant 0 : index
    %c0_0 = arith.constant 0 : index
    %1 = vector.load %arg1[%c0, %c0_0] : memref<9x128xi32, #tpu.memory_space<vmem>>, vector<1x128xi32>
    %2 = vector.broadcast %1 : vector<1x128xi32> to vector<128x128xi32>
    %3 = arith.cmpi eq, %0, %2 : vector<128x128xi32>
    %4 = arith.extui %3 : vector<128x128xi1> to vector<128x128xi32>
    %5 = arith.sitofp %4 : vector<128x128xi32> to vector<128x128xf32>
    %6 = arith.truncf %5 : vector<128x128xf32> to vector<128x128xbf16>
    %c1 = arith.constant 1 : index
    %c0_1 = arith.constant 0 : index
    %7 = vector.load %arg1[%c1, %c0_1] : memref<9x128xi32, #tpu.memory_space<vmem>>, vector<1x128xi32>
    %8 = vector.broadcast %7 : vector<1x128xi32> to vector<128x128xi32>
    %9 = arith.cmpi eq, %0, %8 : vector<128x128xi32>
    %10 = arith.extui %9 : vector<128x128xi1> to vector<128x128xi32>
    %11 = arith.sitofp %10 : vector<128x128xi32> to vector<128x128xf32>
    %12 = arith.truncf %11 : vector<128x128xf32> to vector<128x128xbf16>
    %c2 = arith.constant 2 : index
    %c0_2 = arith.constant 0 : index
    %13 = vector.load %arg1[%c2, %c0_2] : memref<9x128xi32, #tpu.memory_space<vmem>>, vector<1x128xi32>
    %14 = vector.broadcast %13 : vector<1x128xi32> to vector<128x128xi32>
    %15 = arith.cmpi eq, %0, %14 : vector<128x128xi32>
    %16 = arith.extui %15 : vector<128x128xi1> to vector<128x128xi32>
    %17 = arith.sitofp %16 : vector<128x128xi32> to vector<128x128xf32>
    %18 = arith.truncf %17 : vector<128x128xf32> to vector<128x128xbf16>
    %c3 = arith.constant 3 : index
    %c0_3 = arith.constant 0 : index
    %19 = vector.load %arg1[%c3, %c0_3] : memref<9x128xi32, #tpu.memory_space<vmem>>, vector<1x128xi32>
    %20 = vector.broadcast %19 : vector<1x128xi32> to vector<128x128xi32>
    %21 = arith.cmpi eq, %0, %20 : vector<128x128xi32>
    %22 = arith.extui %21 : vector<128x128xi1> to vector<128x128xi32>
    %23 = arith.sitofp %22 : vector<128x128xi32> to vector<128x128xf32>
    %24 = arith.truncf %23 : vector<128x128xf32> to vector<128x128xbf16>
    %c4 = arith.constant 4 : index
    %c0_4 = arith.constant 0 : index
    %25 = vector.load %arg1[%c4, %c0_4] : memref<9x128xi32, #tpu.memory_space<vmem>>, vector<1x128xi32>
    %26 = vector.broadcast %25 : vector<1x128xi32> to vector<128x128xi32>
    %27 = arith.cmpi eq, %0, %26 : vector<128x128xi32>
    %28 = arith.extui %27 : vector<128x128xi1> to vector<128x128xi32>
    %29 = arith.sitofp %28 : vector<128x128xi32> to vector<128x128xf32>
    %30 = arith.truncf %29 : vector<128x128xf32> to vector<128x128xbf16>
    %c5 = arith.constant 5 : index
    %c0_5 = arith.constant 0 : index
    %31 = vector.load %arg1[%c5, %c0_5] : memref<9x128xi32, #tpu.memory_space<vmem>>, vector<1x128xi32>
    %32 = vector.broadcast %31 : vector<1x128xi32> to vector<128x128xi32>
    %33 = arith.cmpi eq, %0, %32 : vector<128x128xi32>
    %34 = arith.extui %33 : vector<128x128xi1> to vector<128x128xi32>
    %35 = arith.sitofp %34 : vector<128x128xi32> to vector<128x128xf32>
    %36 = arith.truncf %35 : vector<128x128xf32> to vector<128x128xbf16>
    %c6 = arith.constant 6 : index
    %c0_6 = arith.constant 0 : index
    %37 = vector.load %arg1[%c6, %c0_6] : memref<9x128xi32, #tpu.memory_space<vmem>>, vector<1x128xi32>
    %38 = vector.broadcast %37 : vector<1x128xi32> to vector<128x128xi32>
    %39 = arith.cmpi eq, %0, %38 : vector<128x128xi32>
    %40 = arith.extui %39 : vector<128x128xi1> to vector<128x128xi32>
    %41 = arith.sitofp %40 : vector<128x128xi32> to vector<128x128xf32>
    %42 = arith.truncf %41 : vector<128x128xf32> to vector<128x128xbf16>
    %c7 = arith.constant 7 : index
    %c0_7 = arith.constant 0 : index
    %43 = vector.load %arg1[%c7, %c0_7] : memref<9x128xi32, #tpu.memory_space<vmem>>, vector<1x128xi32>
    %44 = vector.broadcast %43 : vector<1x128xi32> to vector<128x128xi32>
    %45 = arith.cmpi eq, %0, %44 : vector<128x128xi32>
    %46 = arith.extui %45 : vector<128x128xi1> to vector<128x128xi32>
    %47 = arith.sitofp %46 : vector<128x128xi32> to vector<128x128xf32>
    %48 = arith.truncf %47 : vector<128x128xf32> to vector<128x128xbf16>
    %c8 = arith.constant 8 : index
    %c0_8 = arith.constant 0 : index
    %49 = vector.load %arg1[%c8, %c0_8] : memref<9x128xi32, #tpu.memory_space<vmem>>, vector<1x128xi32>
    %50 = vector.broadcast %49 : vector<1x128xi32> to vector<128x128xi32>
    %51 = arith.cmpi eq, %0, %50 : vector<128x128xi32>
    %52 = arith.extui %51 : vector<128x128xi1> to vector<128x128xi32>
    %53 = arith.sitofp %52 : vector<128x128xi32> to vector<128x128xf32>
    %54 = arith.truncf %53 : vector<128x128xf32> to vector<128x128xbf16>
    %55 = tpu.concatenate %6, %12, %18, %24, %30, %36, %42, %48, %54 in 0 : vector<128x128xbf16>, vector<128x128xbf16>, vector<128x128xbf16>, vector<128x128xbf16>, vector<128x128xbf16>, vector<128x128xbf16>, vector<128x128xbf16>, vector<128x128xbf16>, vector<128x128xbf16> -> vector<1152x128xbf16>
    %c0_9 = arith.constant 0 : index
    %c0_10 = arith.constant 0 : index
    %56 = vector.load %arg2[%c0_9, %c0_10] : memref<64x1152xbf16, #tpu.memory_space<vmem>>, vector<64x1152xbf16>
    %cst = arith.constant dense<0.000000e+00> : vector<64x128xf32>
    %57 = tpu.matmul %56, %55, %cst {dimension_numbers = #tpu.dot_dimension_numbers<[1], [0], [0], [1], [0, 0, 1, 1], [], []>} : vector<64x1152xbf16>, vector<1152x128xbf16>, vector<64x128xf32> -> vector<64x128xf32>
    %58 = vector.extract_strided_slice %57 {offsets = [0, 0], sizes = [32, 128], strides = [1, 1]} : vector<64x128xf32> to vector<32x128xf32>
    %59 = vector.extract_strided_slice %57 {offsets = [32, 0], sizes = [32, 128], strides = [1, 1]} : vector<64x128xf32> to vector<32x128xf32>
    %60 = arith.addf %58, %59 : vector<32x128xf32>
    %61 = tpu.transpose %60, [1, 0] : vector<32x128xf32> -> vector<128x32xf32>
    %c0_11 = arith.constant 0 : index
    %c0_12 = arith.constant 0 : index
    %62 = vector.load %arg3[%c0_11, %c0_12] : memref<128x32xf32, #tpu.memory_space<vmem>>, vector<128x32xf32>
    tpu.vector_store %arg3[%c0_11, %c0_12], %61 {strides = array<i32>} : memref<128x32xf32, #tpu.memory_space<vmem>>, vector<128x32xf32>,
    return
  }
  func.func @transform_0(%arg0: i32) -> (i32, i32) {
    %c0_i32 = arith.constant 0 : i32
    %c0_i32_0 = arith.constant 0 : i32
    return %c0_i32, %arg0 : i32, i32
  }
  func.func @transform_1(%arg0: i32) -> (i32, i32) {
    %c0_i32 = arith.constant 0 : i32
    %c0_i32_0 = arith.constant 0 : i32
    %c0_i32_1 = arith.constant 0 : i32
    return %c0_i32, %c0_i32_0 : i32, i32
  }
  func.func @transform_2(%arg0: i32) -> (i32, i32) {
    %c0_i32 = arith.constant 0 : i32
    %c0_i32_0 = arith.constant 0 : i32
    return %arg0, %c0_i32 : i32, i32
  }
}

</mosaic_0001>

<llo_original>
// kernel: tpu_custom_call.1
$region0: #{tpu_custom_call.1}
  #allocation0 [shape = 'u32[]', space=smem, size = 0x4, offset = 0x4, fixed_abs, tag = 'smem constant byte address 0x4 - core index']
  #allocation1 [shape = 'u32[144,128]{1,0:T(1,128)}', space=vmem, size = 0x12000, scoped, tag = 'internal scratch']
  %s0 = inlined_call_operand.vmem [shape: s32[9,8], index: 0, kind: input, shape index: {}]
  %s1 = inlined_call_operand.hbm [shape: bf16[64,1152], index: 1, kind: input, shape index: {}]
  %s2 = inlined_call_operand.hbm [shape: f32[8,32], index: 2, kind: output, shape index: {}]
  %s3 = sld [smem:[#allocation0]]
  $region22: #{tpu_custom_call.1} parent=0
    _
  %s5 = ssub.s32 1, %s3
  %s6 = scalar_select 0, %s5, %s3
  $region1: #{tpu_custom_call.1} parent=0
    #allocation2 [shape = 'u8[147456]{0}', space=vmem, size = 0x24000, scoped, tag = 'input window, operand 1, single buffered']
    #allocation3 [shape = 's32[1]{0}', space=sflag, size = 0x4, scoped, tag = 'scoped memory for tpu_custom_call.1']
    #allocation4 [shape = 's32[1]{0}', space=sflag, size = 0x4, scoped, tag = 'scoped memory for tpu_custom_call.1']
    #allocation5 [shape = 'u8[65536]{0}', space=vmem, size = 0x10000, scoped, tag = 'output window, operand 0, single buffered']
    %7 = vsyncpa [#allocation3], 0
    %8 = vsyncpa [#allocation4], 0
    // Predicated region
    $region2: #{tpu_custom_call.1} parent=1 // pred_check
      _
    $region3: #{tpu_custom_call.1} parent=1 // pred_check_branch
      %10 = sbr.rel (0) target = $region5
    $region4: #{tpu_custom_call.1} parent=1 // pred_region
      _
    $region5: #{tpu_custom_call.1} parent=1 // pred_fallthru
      _
    // Predicated region
    $region6: #{tpu_custom_call.1} parent=1 // pred_check
      _
    $region7: #{tpu_custom_call.1} parent=1 // pred_check_branch
      %12 = sbr.rel (0) target = $region9
    $region8: #{tpu_custom_call.1} parent=1 // pred_region
      %s14 = ssub.s32 4608, 4608
      %15 = vsyncadd [#allocation3], %s14
      %s16 = sshll.u32 [#allocation2], 4
      %s17 = int_to_ptr.vmem [resolvable:$true] %s16
      %22 = dma.hbm_to_vmem [thread:$0]  %s1, 4608, %s17, [#allocation3], 576, 576, 36
    $region9: #{tpu_custom_call.1} parent=1 // pred_fallthru
      _
    // Predicated region
    $region10: #{tpu_custom_call.1} parent=1 // pred_check
      _
    $region11: #{tpu_custom_call.1} parent=1 // pred_check_branch
      %24 = sbr.rel (0) target = $region13
    $region12: #{tpu_custom_call.1} parent=1 // pred_region
      %25 = dma.done [#allocation3], 4608
    $region13: #{tpu_custom_call.1} parent=1 // pred_fallthru
      _
    %v27 = vlaneseq
    %v28 = vshrl.u32 %v27, 7
    %v29 = vadd.s32 %v28, 8
    %v30 = vadd.s32 %v28, 16
    %v31 = vadd.s32 %v28, 24
    %v32 = vadd.s32 %v28, 32
    %v33 = vadd.s32 %v28, 40
    %v34 = vadd.s32 %v28, 48
    %v35 = vadd.s32 %v28, 56
    %v36 = vadd.s32 %v28, 64
    %v37 = vadd.s32 %v28, 72
    %v38 = vadd.s32 %v28, 80
    %v39 = vadd.s32 %v28, 88
    %v40 = vadd.s32 %v28, 96
    %v41 = vadd.s32 %v28, 104
    %v42 = vadd.s32 %v28, 112
    %v43 = vadd.s32 %v28, 120
    %v44 = vld [vmem:[%s0] sm:$0x1]
    %v45 = vlaneseq
    %v46 = vshrl.u32 %v45, 7
    %v47 = vsub.s32 0, %v46
    %v48 = vrot.slane %v44, %v47
    %vm49 = vcmp.eq.s32.totalorder %v28, %v48
    %vm50 = vcmp.eq.s32.totalorder %v29, %v48
    %vm51 = vcmp.eq.s32.totalorder %v30, %v48
    %vm52 = vcmp.eq.s32.totalorder %v31, %v48
    %vm53 = vcmp.eq.s32.totalorder %v32, %v48
    %vm54 = vcmp.eq.s32.totalorder %v33, %v48
    %vm55 = vcmp.eq.s32.totalorder %v34, %v48
    %vm56 = vcmp.eq.s32.totalorder %v35, %v48
    %vm57 = vcmp.eq.s32.totalorder %v36, %v48
    %vm58 = vcmp.eq.s32.totalorder %v37, %v48
    %vm59 = vcmp.eq.s32.totalorder %v38, %v48
    %vm60 = vcmp.eq.s32.totalorder %v39, %v48
    %vm61 = vcmp.eq.s32.totalorder %v40, %v48
    %vm62 = vcmp.eq.s32.totalorder %v41, %v48
    %vm63 = vcmp.eq.s32.totalorder %v42, %v48
    %vm64 = vcmp.eq.s32.totalorder %v43, %v48
    %v65 = vsel %vm49, 1, 0
    %v66 = vsel %vm50, 1, 0
    %v67 = vsel %vm51, 1, 0
    %v68 = vsel %vm52, 1, 0
    %v69 = vsel %vm53, 1, 0
    %v70 = vsel %vm54, 1, 0
    %v71 = vsel %vm55, 1, 0
    %v72 = vsel %vm56, 1, 0
    %v73 = vsel %vm57, 1, 0
    %v74 = vsel %vm58, 1, 0
    %v75 = vsel %vm59, 1, 0
    %v76 = vsel %vm60, 1, 0
    %v77 = vsel %vm61, 1, 0
    %v78 = vsel %vm62, 1, 0
    %v79 = vsel %vm63, 1, 0
    %v80 = vsel %vm64, 1, 0
    %v81 = vcvt.s32.f32 %v65
    %v82 = vcvt.s32.f32 %v66
    %v83 = vcvt.s32.f32 %v67
    %v84 = vcvt.s32.f32 %v68
    %v85 = vcvt.s32.f32 %v69
    %v86 = vcvt.s32.f32 %v70
    %v87 = vcvt.s32.f32 %v71
    %v88 = vcvt.s32.f32 %v72
    %v89 = vcvt.s32.f32 %v73
    %v90 = vcvt.s32.f32 %v74
    %v91 = vcvt.s32.f32 %v75
    %v92 = vcvt.s32.f32 %v76
    %v93 = vcvt.s32.f32 %v77
    %v94 = vcvt.s32.f32 %v78
    %v95 = vcvt.s32.f32 %v79
    %v96 = vcvt.s32.f32 %v80
    %v97 = vpack.c.bf16 %v82, %v81
    %v98 = vpack.c.bf16 %v84, %v83
    %v99 = vpack.c.bf16 %v86, %v85
    %v100 = vpack.c.bf16 %v88, %v87
    %v101 = vpack.c.bf16 %v90, %v89
    %v102 = vpack.c.bf16 %v92, %v91
    %v103 = vpack.c.bf16 %v94, %v93
    %v104 = vpack.c.bf16 %v96, %v95
    %v105 = vld [vmem:[%s0 + $0x1] sm:$0x1]
    %v106 = vlaneseq
    %v107 = vshrl.u32 %v106, 7
    %v108 = vsub.s32 0, %v107
    %v109 = vrot.slane %v105, %v108
    %vm110 = vcmp.eq.s32.totalorder %v28, %v109
    %vm111 = vcmp.eq.s32.totalorder %v29, %v109
    %vm112 = vcmp.eq.s32.totalorder %v30, %v109
    %vm113 = vcmp.eq.s32.totalorder %v31, %v109
    %vm114 = vcmp.eq.s32.totalorder %v32, %v109
    %vm115 = vcmp.eq.s32.totalorder %v33, %v109
    %vm116 = vcmp.eq.s32.totalorder %v34, %v109
    %vm117 = vcmp.eq.s32.totalorder %v35, %v109
    %vm118 = vcmp.eq.s32.totalorder %v36, %v109
    %vm119 = vcmp.eq.s32.totalorder %v37, %v109
    %vm120 = vcmp.eq.s32.totalorder %v38, %v109
    %vm121 = vcmp.eq.s32.totalorder %v39, %v109
    %vm122 = vcmp.eq.s32.totalorder %v40, %v109
    %vm123 = vcmp.eq.s32.totalorder %v41, %v109
    %vm124 = vcmp.eq.s32.totalorder %v42, %v109
    %vm125 = vcmp.eq.s32.totalorder %v43, %v109
    %v126 = vsel %vm110, 1, 0
    %v127 = vsel %vm111, 1, 0
    %v128 = vsel %vm112, 1, 0
    %v129 = vsel %vm113, 1, 0
    %v130 = vsel %vm114, 1, 0
    %v131 = vsel %vm115, 1, 0
    %v132 = vsel %vm116, 1, 0
    %v133 = vsel %vm117, 1, 0
    %v134 = vsel %vm118, 1, 0
    %v135 = vsel %vm119, 1, 0
    %v136 = vsel %vm120, 1, 0
    %v137 = vsel %vm121, 1, 0
    %v138 = vsel %vm122, 1, 0
    %v139 = vsel %vm123, 1, 0
    %v140 = vsel %vm124, 1, 0
    %v141 = vsel %vm125, 1, 0
    %v142 = vcvt.s32.f32 %v126
    %v143 = vcvt.s32.f32 %v127
    %v144 = vcvt.s32.f32 %v128
    %v145 = vcvt.s32.f32 %v129
    %v146 = vcvt.s32.f32 %v130
    %v147 = vcvt.s32.f32 %v131
    %v148 = vcvt.s32.f32 %v132
    %v149 = vcvt.s32.f32 %v133
    %v150 = vcvt.s32.f32 %v134
    %v151 = vcvt.s32.f32 %v135
    %v152 = vcvt.s32.f32 %v136
    %v153 = vcvt.s32.f32 %v137
    %v154 = vcvt.s32.f32 %v138
    %v155 = vcvt.s32.f32 %v139
    %v156 = vcvt.s32.f32 %v140
    %v157 = vcvt.s32.f32 %v141
    %v158 = vpack.c.bf16 %v143, %v142
    %v159 = vpack.c.bf16 %v145, %v144
    %v160 = vpack.c.bf16 %v147, %v146
    %v161 = vpack.c.bf16 %v149, %v148
    %v162 = vpack.c.bf16 %v151, %v150
    %v163 = vpack.c.bf16 %v153, %v152
    %v164 = vpack.c.bf16 %v155, %v154
    %v165 = vpack.c.bf16 %v157, %v156
    %v166 = vld [vmem:[%s0 + $0x2] sm:$0x1]
    %v167 = vlaneseq
    %v168 = vshrl.u32 %v167, 7
    %v169 = vsub.s32 0, %v168
    %v170 = vrot.slane %v166, %v169
    %vm171 = vcmp.eq.s32.totalorder %v28, %v170
    %vm172 = vcmp.eq.s32.totalorder %v29, %v170
    %vm173 = vcmp.eq.s32.totalorder %v30, %v170
    %vm174 = vcmp.eq.s32.totalorder %v31, %v170
    %vm175 = vcmp.eq.s32.totalorder %v32, %v170
    %vm176 = vcmp.eq.s32.totalorder %v33, %v170
    %vm177 = vcmp.eq.s32.totalorder %v34, %v170
    %vm178 = vcmp.eq.s32.totalorder %v35, %v170
    %vm179 = vcmp.eq.s32.totalorder %v36, %v170
    %vm180 = vcmp.eq.s32.totalorder %v37, %v170
    %vm181 = vcmp.eq.s32.totalorder %v38, %v170
    %vm182 = vcmp.eq.s32.totalorder %v39, %v170
    %vm183 = vcmp.eq.s32.totalorder %v40, %v170
    %vm184 = vcmp.eq.s32.totalorder %v41, %v170
    %vm185 = vcmp.eq.s32.totalorder %v42, %v170
    %vm186 = vcmp.eq.s32.totalorder %v43, %v170
    %v187 = vsel %vm171, 1, 0
    %v188 = vsel %vm172, 1, 0
    %v189 = vsel %vm173, 1, 0
    %v190 = vsel %vm174, 1, 0
    %v191 = vsel %vm175, 1, 0
    %v192 = vsel %vm176, 1, 0
    %v193 = vsel %vm177, 1, 0
    %v194 = vsel %vm178, 1, 0
    %v195 = vsel %vm179, 1, 0
    %v196 = vsel %vm180, 1, 0
    %v197 = vsel %vm181, 1, 0
    %v198 = vsel %vm182, 1, 0
    %v199 = vsel %vm183, 1, 0
    %v200 = vsel %vm184, 1, 0
    %v201 = vsel %vm185, 1, 0
    %v202 = vsel %vm186, 1, 0
    %v203 = vcvt.s32.f32 %v187
    %v204 = vcvt.s32.f32 %v188
    %v205 = vcvt.s32.f32 %v189
    %v206 = vcvt.s32.f32 %v190
    %v207 = vcvt.s32.f32 %v191
    %v208 = vcvt.s32.f32 %v192
    %v209 = vcvt.s32.f32 %v193
    %v210 = vcvt.s32.f32 %v194
    %v211 = vcvt.s32.f32 %v195
    %v212 = vcvt.s32.f32 %v196
    %v213 = vcvt.s32.f32 %v197
    %v214 = vcvt.s32.f32 %v198
    %v215 = vcvt.s32.f32 %v199
    %v216 = vcvt.s32.f32 %v200
    %v217 = vcvt.s32.f32 %v201
    %v218 = vcvt.s32.f32 %v202
    %v219 = vpack.c.bf16 %v204, %v203
    %v220 = vpack.c.bf16 %v206, %v205
    %v221 = vpack.c.bf16 %v208, %v207
    %v222 = vpack.c.bf16 %v210, %v209
    %v223 = vpack.c.bf16 %v212, %v211
    %v224 = vpack.c.bf16 %v214, %v213
    %v225 = vpack.c.bf16 %v216, %v215
    %v226 = vpack.c.bf16 %v218, %v217
    %v227 = vld [vmem:[%s0 + $0x3] sm:$0x1]
    %v228 = vlaneseq
    %v229 = vshrl.u32 %v228, 7
    %v230 = vsub.s32 0, %v229
    %v231 = vrot.slane %v227, %v230
    %vm232 = vcmp.eq.s32.totalorder %v28, %v231
    %vm233 = vcmp.eq.s32.totalorder %v29, %v231
    %vm234 = vcmp.eq.s32.totalorder %v30, %v231
    %vm235 = vcmp.eq.s32.totalorder %v31, %v231
    %vm236 = vcmp.eq.s32.totalorder %v32, %v231
    %vm237 = vcmp.eq.s32.totalorder %v33, %v231
    %vm238 = vcmp.eq.s32.totalorder %v34, %v231
    %vm239 = vcmp.eq.s32.totalorder %v35, %v231
    %vm240 = vcmp.eq.s32.totalorder %v36, %v231
    %vm241 = vcmp.eq.s32.totalorder %v37, %v231
    %vm242 = vcmp.eq.s32.totalorder %v38, %v231
    %vm243 = vcmp.eq.s32.totalorder %v39, %v231
    %vm244 = vcmp.eq.s32.totalorder %v40, %v231
    %vm245 = vcmp.eq.s32.totalorder %v41, %v231
    %vm246 = vcmp.eq.s32.totalorder %v42, %v231
    %vm247 = vcmp.eq.s32.totalorder %v43, %v231
    %v248 = vsel %vm232, 1, 0
    %v249 = vsel %vm233, 1, 0
    %v250 = vsel %vm234, 1, 0
    %v251 = vsel %vm235, 1, 0
    %v252 = vsel %vm236, 1, 0
    %v253 = vsel %vm237, 1, 0
    %v254 = vsel %vm238, 1, 0
    %v255 = vsel %vm239, 1, 0
    %v256 = vsel %vm240, 1, 0
    %v257 = vsel %vm241, 1, 0
    %v258 = vsel %vm242, 1, 0
    %v259 = vsel %vm243, 1, 0
    %v260 = vsel %vm244, 1, 0
    %v261 = vsel %vm245, 1, 0
    %v262 = vsel %vm246, 1, 0
    %v263 = vsel %vm247, 1, 0
    %v264 = vcvt.s32.f32 %v248
    %v265 = vcvt.s32.f32 %v249
    %v266 = vcvt.s32.f32 %v250
    %v267 = vcvt.s32.f32 %v251
    %v268 = vcvt.s32.f32 %v252
    %v269 = vcvt.s32.f32 %v253
    %v270 = vcvt.s32.f32 %v254
    %v271 = vcvt.s32.f32 %v255
    %v272 = vcvt.s32.f32 %v256
    %v273 = vcvt.s32.f32 %v257
    %v274 = vcvt.s32.f32 %v258
    %v275 = vcvt.s32.f32 %v259
    %v276 = vcvt.s32.f32 %v260
    %v277 = vcvt.s32.f32 %v261
    %v278 = vcvt.s32.f32 %v262
    %v279 = vcvt.s32.f32 %v263
    %v280 = vpack.c.bf16 %v265, %v264
    %v281 = vpack.c.bf16 %v267, %v266
    %v282 = vpack.c.bf16 %v269, %v268
    %v283 = vpack.c.bf16 %v271, %v270
    %v284 = vpack.c.bf16 %v273, %v272
    %v285 = vpack.c.bf16 %v275, %v274
    %v286 = vpack.c.bf16 %v277, %v276
    %v287 = vpack.c.bf16 %v279, %v278
    %v288 = vld [vmem:[%s0 + $0x4] sm:$0x1]
    %v289 = vlaneseq
    %v290 = vshrl.u32 %v289, 7
    %v291 = vsub.s32 0, %v290
    %v292 = vrot.slane %v288, %v291
    %vm293 = vcmp.eq.s32.totalorder %v28, %v292
    %vm294 = vcmp.eq.s32.totalorder %v29, %v292
    %vm295 = vcmp.eq.s32.totalorder %v30, %v292
    %vm296 = vcmp.eq.s32.totalorder %v31, %v292
    %vm297 = vcmp.eq.s32.totalorder %v32, %v292
    %vm298 = vcmp.eq.s32.totalorder %v33, %v292
    %vm299 = vcmp.eq.s32.totalorder %v34, %v292
    %vm300 = vcmp.eq.s32.totalorder %v35, %v292
    %vm301 = vcmp.eq.s32.totalorder %v36, %v292
    %vm302 = vcmp.eq.s32.totalorder %v37, %v292
    %vm303 = vcmp.eq.s32.totalorder %v38, %v292
    %vm304 = vcmp.eq.s32.totalorder %v39, %v292
    %vm305 = vcmp.eq.s32.totalorder %v40, %v292
    %vm306 = vcmp.eq.s32.totalorder %v41, %v292
    %vm307 = vcmp.eq.s32.totalorder %v42, %v292
    %vm308 = vcmp.eq.s32.totalorder %v43, %v292
    %v309 = vsel %vm293, 1, 0
    %v310 = vsel %vm294, 1, 0
    %v311 = vsel %vm295, 1, 0
    %v312 = vsel %vm296, 1, 0
    %v313 = vsel %vm297, 1, 0
    %v314 = vsel %vm298, 1, 0
    %v315 = vsel %vm299, 1, 0
    %v316 = vsel %vm300, 1, 0
    %v317 = vsel %vm301, 1, 0
    %v318 = vsel %vm302, 1, 0
    %v319 = vsel %vm303, 1, 0
    %v320 = vsel %vm304, 1, 0
    %v321 = vsel %vm305, 1, 0
    %v322 = vsel %vm306, 1, 0
    %v323 = vsel %vm307, 1, 0
    %v324 = vsel %vm308, 1, 0
    %v325 = vcvt.s32.f32 %v309
    %v326 = vcvt.s32.f32 %v310
    %v327 = vcvt.s32.f32 %v311
    %v328 = vcvt.s32.f32 %v312
    %v329 = vcvt.s32.f32 %v313
    %v330 = vcvt.s32.f32 %v314
    %v331 = vcvt.s32.f32 %v315
    %v332 = vcvt.s32.f32 %v316
    %v333 = vcvt.s32.f32 %v317
    %v334 = vcvt.s32.f32 %v318
    %v335 = vcvt.s32.f32 %v319
    %v336 = vcvt.s32.f32 %v320
    %v337 = vcvt.s32.f32 %v321
    %v338 = vcvt.s32.f32 %v322
    %v339 = vcvt.s32.f32 %v323
    %v340 = vcvt.s32.f32 %v324
    %v341 = vpack.c.bf16 %v326, %v325
    %v342 = vpack.c.bf16 %v328, %v327
    %v343 = vpack.c.bf16 %v330, %v329
    %v344 = vpack.c.bf16 %v332, %v331
    %v345 = vpack.c.bf16 %v334, %v333
    %v346 = vpack.c.bf16 %v336, %v335
    %v347 = vpack.c.bf16 %v338, %v337
    %v348 = vpack.c.bf16 %v340, %v339
    %v349 = vld [vmem:[%s0 + $0x5] sm:$0x1]
    %v350 = vlaneseq
    %v351 = vshrl.u32 %v350, 7
    %v352 = vsub.s32 0, %v351
    %v353 = vrot.slane %v349, %v352
    %vm354 = vcmp.eq.s32.totalorder %v28, %v353
    %vm355 = vcmp.eq.s32.totalorder %v29, %v353
    %vm356 = vcmp.eq.s32.totalorder %v30, %v353
    %vm357 = vcmp.eq.s32.totalorder %v31, %v353
    %vm358 = vcmp.eq.s32.totalorder %v32, %v353
    %vm359 = vcmp.eq.s32.totalorder %v33, %v353
    %vm360 = vcmp.eq.s32.totalorder %v34, %v353
    %vm361 = vcmp.eq.s32.totalorder %v35, %v353
    %vm362 = vcmp.eq.s32.totalorder %v36, %v353
    %vm363 = vcmp.eq.s32.totalorder %v37, %v353
    %vm364 = vcmp.eq.s32.totalorder %v38, %v353
    %vm365 = vcmp.eq.s32.totalorder %v39, %v353
    %vm366 = vcmp.eq.s32.totalorder %v40, %v353
    %vm367 = vcmp.eq.s32.totalorder %v41, %v353
    %vm368 = vcmp.eq.s32.totalorder %v42, %v353
    %vm369 = vcmp.eq.s32.totalorder %v43, %v353
    %v370 = vsel %vm354, 1, 0
    %v371 = vsel %vm355, 1, 0
    %v372 = vsel %vm356, 1, 0
    %v373 = vsel %vm357, 1, 0
    %v374 = vsel %vm358, 1, 0
    %v375 = vsel %vm359, 1, 0
    %v376 = vsel %vm360, 1, 0
    %v377 = vsel %vm361, 1, 0
    %v378 = vsel %vm362, 1, 0
    %v379 = vsel %vm363, 1, 0
    %v380 = vsel %vm364, 1, 0
    %v381 = vsel %vm365, 1, 0
    %v382 = vsel %vm366, 1, 0
    %v383 = vsel %vm367, 1, 0
    %v384 = vsel %vm368, 1, 0
    %v385 = vsel %vm369, 1, 0
    %v386 = vcvt.s32.f32 %v370
    %v387 = vcvt.s32.f32 %v371
    %v388 = vcvt.s32.f32 %v372
    %v389 = vcvt.s32.f32 %v373
    %v390 = vcvt.s32.f32 %v374
    %v391 = vcvt.s32.f32 %v375
    %v392 = vcvt.s32.f32 %v376
    %v393 = vcvt.s32.f32 %v377
    %v394 = vcvt.s32.f32 %v378
    %v395 = vcvt.s32.f32 %v379
    %v396 = vcvt.s32.f32 %v380
    %v397 = vcvt.s32.f32 %v381
    %v398 = vcvt.s32.f32 %v382
    %v399 = vcvt.s32.f32 %v383
    %v400 = vcvt.s32.f32 %v384
    %v401 = vcvt.s32.f32 %v385
    %v402 = vpack.c.bf16 %v387, %v386
    %v403 = vpack.c.bf16 %v389, %v388
    %v404 = vpack.c.bf16 %v391, %v390
    %v405 = vpack.c.bf16 %v393, %v392
    %v406 = vpack.c.bf16 %v395, %v394
    %v407 = vpack.c.bf16 %v397, %v396
    %v408 = vpack.c.bf16 %v399, %v398
    %v409 = vpack.c.bf16 %v401, %v400
    %v410 = vld [vmem:[%s0 + $0x6] sm:$0x1]
    %v411 = vlaneseq
    %v412 = vshrl.u32 %v411, 7
    %v413 = vsub.s32 0, %v412
    %v414 = vrot.slane %v410, %v413
    %vm415 = vcmp.eq.s32.totalorder %v28, %v414
    %vm416 = vcmp.eq.s32.totalorder %v29, %v414
    %vm417 = vcmp.eq.s32.totalorder %v30, %v414
    %vm418 = vcmp.eq.s32.totalorder %v31, %v414
    %vm419 = vcmp.eq.s32.totalorder %v32, %v414
    %vm420 = vcmp.eq.s32.totalorder %v33, %v414
    %vm421 = vcmp.eq.s32.totalorder %v34, %v414
    %vm422 = vcmp.eq.s32.totalorder %v35, %v414
    %vm423 = vcmp.eq.s32.totalorder %v36, %v414
    %vm424 = vcmp.eq.s32.totalorder %v37, %v414
    %vm425 = vcmp.eq.s32.totalorder %v38, %v414
    %vm426 = vcmp.eq.s32.totalorder %v39, %v414
    %vm427 = vcmp.eq.s32.totalorder %v40, %v414
    %vm428 = vcmp.eq.s32.totalorder %v41, %v414
    %vm429 = vcmp.eq.s32.totalorder %v42, %v414
    %vm430 = vcmp.eq.s32.totalorder %v43, %v414
    %v431 = vsel %vm415, 1, 0
    %v432 = vsel %vm416, 1, 0
    %v433 = vsel %vm417, 1, 0
    %v434 = vsel %vm418, 1, 0
    %v435 = vsel %vm419, 1, 0
    %v436 = vsel %vm420, 1, 0
    %v437 = vsel %vm421, 1, 0
    %v438 = vsel %vm422, 1, 0
    %v439 = vsel %vm423, 1, 0
    %v440 = vsel %vm424, 1, 0
    %v441 = vsel %vm425, 1, 0
    %v442 = vsel %vm426, 1, 0
    %v443 = vsel %vm427, 1, 0
    %v444 = vsel %vm428, 1, 0
    %v445 = vsel %vm429, 1, 0
    %v446 = vsel %vm430, 1, 0
    %v447 = vcvt.s32.f32 %v431
    %v448 = vcvt.s32.f32 %v432
    %v449 = vcvt.s32.f32 %v433
    %v450 = vcvt.s32.f32 %v434
    %v451 = vcvt.s32.f32 %v435
    %v452 = vcvt.s32.f32 %v436
    %v453 = vcvt.s32.f32 %v437
    %v454 = vcvt.s32.f32 %v438
    %v455 = vcvt.s32.f32 %v439
    %v456 = vcvt.s32.f32 %v440
    %v457 = vcvt.s32.f32 %v441
    %v458 = vcvt.s32.f32 %v442
    %v459 = vcvt.s32.f32 %v443
    %v460 = vcvt.s32.f32 %v444
    %v461 = vcvt.s32.f32 %v445
    %v462 = vcvt.s32.f32 %v446
    %v463 = vpack.c.bf16 %v448, %v447
    %v464 = vpack.c.bf16 %v450, %v449
    %v465 = vpack.c.bf16 %v452, %v451
    %v466 = vpack.c.bf16 %v454, %v453
    %v467 = vpack.c.bf16 %v456, %v455
    %v468 = vpack.c.bf16 %v458, %v457
    %v469 = vpack.c.bf16 %v460, %v459
    %v470 = vpack.c.bf16 %v462, %v461
    %v471 = vld [vmem:[%s0 + $0x7] sm:$0x1]
    %v472 = vlaneseq
    %v473 = vshrl.u32 %v472, 7
    %v474 = vsub.s32 0, %v473
    %v475 = vrot.slane %v471, %v474
    %vm476 = vcmp.eq.s32.totalorder %v28, %v475
    %vm477 = vcmp.eq.s32.totalorder %v29, %v475
    %vm478 = vcmp.eq.s32.totalorder %v30, %v475
    %vm479 = vcmp.eq.s32.totalorder %v31, %v475
    %vm480 = vcmp.eq.s32.totalorder %v32, %v475
    %vm481 = vcmp.eq.s32.totalorder %v33, %v475
    %vm482 = vcmp.eq.s32.totalorder %v34, %v475
    %vm483 = vcmp.eq.s32.totalorder %v35, %v475
    %vm484 = vcmp.eq.s32.totalorder %v36, %v475
    %vm485 = vcmp.eq.s32.totalorder %v37, %v475
    %vm486 = vcmp.eq.s32.totalorder %v38, %v475
    %vm487 = vcmp.eq.s32.totalorder %v39, %v475
    %vm488 = vcmp.eq.s32.totalorder %v40, %v475
    %vm489 = vcmp.eq.s32.totalorder %v41, %v475
    %vm490 = vcmp.eq.s32.totalorder %v42, %v475
    %vm491 = vcmp.eq.s32.totalorder %v43, %v475
    %v492 = vsel %vm476, 1, 0
    %v493 = vsel %vm477, 1, 0
    %v494 = vsel %vm478, 1, 0
    %v495 = vsel %vm479, 1, 0
    %v496 = vsel %vm480, 1, 0
    %v497 = vsel %vm481, 1, 0
    %v498 = vsel %vm482, 1, 0
    %v499 = vsel %vm483, 1, 0
    %v500 = vsel %vm484, 1, 0
    %v501 = vsel %vm485, 1, 0
    %v502 = vsel %vm486, 1, 0
    %v503 = vsel %vm487, 1, 0
    %v504 = vsel %vm488, 1, 0
    %v505 = vsel %vm489, 1, 0
    %v506 = vsel %vm490, 1, 0
    %v507 = vsel %vm491, 1, 0
    %v508 = vcvt.s32.f32 %v492
    %v509 = vcvt.s32.f32 %v493
    %v510 = vcvt.s32.f32 %v494
    %v511 = vcvt.s32.f32 %v495
    %v512 = vcvt.s32.f32 %v496
    %v513 = vcvt.s32.f32 %v497
    %v514 = vcvt.s32.f32 %v498
    %v515 = vcvt.s32.f32 %v499
    %v516 = vcvt.s32.f32 %v500
    %v517 = vcvt.s32.f32 %v501
    %v518 = vcvt.s32.f32 %v502
    %v519 = vcvt.s32.f32 %v503
    %v520 = vcvt.s32.f32 %v504
    %v521 = vcvt.s32.f32 %v505
    %v522 = vcvt.s32.f32 %v506
    %v523 = vcvt.s32.f32 %v507
    %v524 = vpack.c.bf16 %v509, %v508
    %v525 = vpack.c.bf16 %v511, %v510
    %v526 = vpack.c.bf16 %v513, %v512
    %v527 = vpack.c.bf16 %v515, %v514
    %v528 = vpack.c.bf16 %v517, %v516
    %v529 = vpack.c.bf16 %v519, %v518
    %v530 = vpack.c.bf16 %v521, %v520
    %v531 = vpack.c.bf16 %v523, %v522
    %v532 = vld [vmem:[%s0 + $0x8] sm:$0x1]
    %v533 = vlaneseq
    %v534 = vshrl.u32 %v533, 7
    %v535 = vsub.s32 0, %v534
    %v536 = vrot.slane %v532, %v535
    %vm537 = vcmp.eq.s32.totalorder %v28, %v536
    %vm538 = vcmp.eq.s32.totalorder %v29, %v536
    %vm539 = vcmp.eq.s32.totalorder %v30, %v536
    %vm540 = vcmp.eq.s32.totalorder %v31, %v536
    %vm541 = vcmp.eq.s32.totalorder %v32, %v536
    %vm542 = vcmp.eq.s32.totalorder %v33, %v536
    %vm543 = vcmp.eq.s32.totalorder %v34, %v536
    %vm544 = vcmp.eq.s32.totalorder %v35, %v536
    %vm545 = vcmp.eq.s32.totalorder %v36, %v536
    %vm546 = vcmp.eq.s32.totalorder %v37, %v536
    %vm547 = vcmp.eq.s32.totalorder %v38, %v536
    %vm548 = vcmp.eq.s32.totalorder %v39, %v536
    %vm549 = vcmp.eq.s32.totalorder %v40, %v536
    %vm550 = vcmp.eq.s32.totalorder %v41, %v536
    %vm551 = vcmp.eq.s32.totalorder %v42, %v536
    %vm552 = vcmp.eq.s32.totalorder %v43, %v536
    %v553 = vsel %vm537, 1, 0
    %v554 = vsel %vm538, 1, 0
    %v555 = vsel %vm539, 1, 0
    %v556 = vsel %vm540, 1, 0
    %v557 = vsel %vm541, 1, 0
    %v558 = vsel %vm542, 1, 0
    %v559 = vsel %vm543, 1, 0
    %v560 = vsel %vm544, 1, 0
    %v561 = vsel %vm545, 1, 0
    %v562 = vsel %vm546, 1, 0
    %v563 = vsel %vm547, 1, 0
    %v564 = vsel %vm548, 1, 0
    %v565 = vsel %vm549, 1, 0
    %v566 = vsel %vm550, 1, 0
    %v567 = vsel %vm551, 1, 0
    %v568 = vsel %vm552, 1, 0
    %v569 = vcvt.s32.f32 %v553
    %v570 = vcvt.s32.f32 %v554
    %v571 = vcvt.s32.f32 %v555
    %v572 = vcvt.s32.f32 %v556
    %v573 = vcvt.s32.f32 %v557
    %v574 = vcvt.s32.f32 %v558
    %v575 = vcvt.s32.f32 %v559
    %v576 = vcvt.s32.f32 %v560
    %v577 = vcvt.s32.f32 %v561
    %v578 = vcvt.s32.f32 %v562
    %v579 = vcvt.s32.f32 %v563
    %v580 = vcvt.s32.f32 %v564
    %v581 = vcvt.s32.f32 %v565
    %v582 = vcvt.s32.f32 %v566
    %v583 = vcvt.s32.f32 %v567
    %v584 = vcvt.s32.f32 %v568
    %v585 = vpack.c.bf16 %v570, %v569
    %v586 = vpack.c.bf16 %v572, %v571
    %v587 = vpack.c.bf16 %v574, %v573
    %v588 = vpack.c.bf16 %v576, %v575
    %v589 = vpack.c.bf16 %v578, %v577
    %v590 = vpack.c.bf16 %v580, %v579
    %v591 = vpack.c.bf16 %v582, %v581
    %v592 = vpack.c.bf16 %v584, %v583
    %v593 = vld [vmem:[#allocation2] sm:$0xff]
    %v594 = vld [vmem:[#allocation2 + $0x8] sm:$0xff]
    %v595 = vld [vmem:[#allocation2 + $0x10] sm:$0xff]
    %v596 = vld [vmem:[#allocation2 + $0x18] sm:$0xff]
    %v597 = vld [vmem:[#allocation2 + $0x20] sm:$0xf]
    %v598 = vld [vmem:[#allocation2 + $0x24] sm:$0xff]
    %v599 = vld [vmem:[#allocation2 + $0x2c] sm:$0xff]
    %v600 = vld [vmem:[#allocation2 + $0x34] sm:$0xff]
    %v601 = vld [vmem:[#allocation2 + $0x3c] sm:$0xff]
    %v602 = vld [vmem:[#allocation2 + $0x44] sm:$0xf]
    %v603 = vld [vmem:[#allocation2 + $0x48] sm:$0xff]
    %v604 = vld [vmem:[#allocation2 + $0x50] sm:$0xff]
    %v605 = vld [vmem:[#allocation2 + $0x58] sm:$0xff]
    %v606 = vld [vmem:[#allocation2 + $0x60] sm:$0xff]
    %v607 = vld [vmem:[#allocation2 + $0x68] sm:$0xf]
    %v608 = vld [vmem:[#allocation2 + $0x6c] sm:$0xff]
    %v609 = vld [vmem:[#allocation2 + $0x74] sm:$0xff]
    %v610 = vld [vmem:[#allocation2 + $0x7c] sm:$0xff]
    %v611 = vld [vmem:[#allocation2 + $0x84] sm:$0xff]
    %v612 = vld [vmem:[#allocation2 + $0x8c] sm:$0xf]
    %v613 = vld [vmem:[#allocation2 + $0x90] sm:$0xff]
    %v614 = vld [vmem:[#allocation2 + $0x98] sm:$0xff]
    %v615 = vld [vmem:[#allocation2 + $0xa0] sm:$0xff]
    %v616 = vld [vmem:[#allocation2 + $0xa8] sm:$0xff]
    %v617 = vld [vmem:[#allocation2 + $0xb0] sm:$0xf]
    %v618 = vld [vmem:[#allocation2 + $0xb4] sm:$0xff]
    %v619 = vld [vmem:[#allocation2 + $0xbc] sm:$0xff]
    %v620 = vld [vmem:[#allocation2 + $0xc4] sm:$0xff]
    %v621 = vld [vmem:[#allocation2 + $0xcc] sm:$0xff]
    %v622 = vld [vmem:[#allocation2 + $0xd4] sm:$0xf]
    %v623 = vld [vmem:[#allocation2 + $0xd8] sm:$0xff]
    %v624 = vld [vmem:[#allocation2 + $0xe0] sm:$0xff]
    %v625 = vld [vmem:[#allocation2 + $0xe8] sm:$0xff]
    %v626 = vld [vmem:[#allocation2 + $0xf0] sm:$0xff]
    %v627 = vld [vmem:[#allocation2 + $0xf8] sm:$0xf]
    %v628 = vld [vmem:[#allocation2 + $0xfc] sm:$0xff]
    %v629 = vld [vmem:[#allocation2 + $0x104] sm:$0xff]
    %v630 = vld [vmem:[#allocation2 + $0x10c] sm:$0xff]
    %v631 = vld [vmem:[#allocation2 + $0x114] sm:$0xff]
    %v632 = vld [vmem:[#allocation2 + $0x11c] sm:$0xf]
    %v673 = vunpack.c.l.b16 %v593
    %v674 = vunpack.c.h.b16 %v593
    %v675 = vunpack.c.l.b16 %v594
    %v676 = vunpack.c.h.b16 %v594
    %v677 = vunpack.c.l.b16 %v595
    %v678 = vunpack.c.h.b16 %v595
    %v679 = vunpack.c.l.b16 %v596
    %v680 = vunpack.c.h.b16 %v596
    %v681 = vunpack.c.l.b16 %v597
    %v682 = vunpack.c.l.b16 %v598
    %v683 = vunpack.c.h.b16 %v598
    %v684 = vunpack.c.l.b16 %v599
    %v685 = vunpack.c.h.b16 %v599
    %v686 = vunpack.c.l.b16 %v600
    %v687 = vunpack.c.h.b16 %v600
    %v688 = vunpack.c.l.b16 %v601
    %v689 = vunpack.c.h.b16 %v601
    %v690 = vunpack.c.l.b16 %v602
    %v691 = vunpack.c.l.b16 %v603
    %v692 = vunpack.c.h.b16 %v603
    %v693 = vunpack.c.l.b16 %v604
    %v694 = vunpack.c.h.b16 %v604
    %v695 = vunpack.c.l.b16 %v605
    %v696 = vunpack.c.h.b16 %v605
    %v697 = vunpack.c.l.b16 %v606
    %v698 = vunpack.c.h.b16 %v606
    %v699 = vunpack.c.l.b16 %v607
    %v700 = vunpack.c.l.b16 %v608
    %v701 = vunpack.c.h.b16 %v608
    %v702 = vunpack.c.l.b16 %v609
    %v703 = vunpack.c.h.b16 %v609
    %v704 = vunpack.c.l.b16 %v610
    %v705 = vunpack.c.h.b16 %v610
    %v706 = vunpack.c.l.b16 %v611
    %v707 = vunpack.c.h.b16 %v611
    %v708 = vunpack.c.l.b16 %v612
    %v709 = vunpack.c.l.b16 %v613
    %v710 = vunpack.c.h.b16 %v613
    %v711 = vunpack.c.l.b16 %v614
    %v712 = vunpack.c.h.b16 %v614
    %v713 = vunpack.c.l.b16 %v615
    %v714 = vunpack.c.h.b16 %v615
    %v715 = vunpack.c.l.b16 %v616
    %v716 = vunpack.c.h.b16 %v616
    %v717 = vunpack.c.l.b16 %v617
    %v718 = vunpack.c.l.b16 %v618
    %v719 = vunpack.c.h.b16 %v618
    %v720 = vunpack.c.l.b16 %v619
    %v721 = vunpack.c.h.b16 %v619
    %v722 = vunpack.c.l.b16 %v620
    %v723 = vunpack.c.h.b16 %v620
    %v724 = vunpack.c.l.b16 %v621
    %v725 = vunpack.c.h.b16 %v621
    %v726 = vunpack.c.l.b16 %v622
    %v727 = vunpack.c.l.b16 %v623
    %v728 = vunpack.c.h.b16 %v623
    %v729 = vunpack.c.l.b16 %v624
    %v730 = vunpack.c.h.b16 %v624
    %v731 = vunpack.c.l.b16 %v625
    %v732 = vunpack.c.h.b16 %v625
    %v733 = vunpack.c.l.b16 %v626
    %v734 = vunpack.c.h.b16 %v626
    %v735 = vunpack.c.l.b16 %v627
    %v736 = vunpack.c.l.b16 %v628
    %v737 = vunpack.c.h.b16 %v628
    %v738 = vunpack.c.l.b16 %v629
    %v739 = vunpack.c.h.b16 %v629
    %v740 = vunpack.c.l.b16 %v630
    %v741 = vunpack.c.h.b16 %v630
    %v742 = vunpack.c.l.b16 %v631
    %v743 = vunpack.c.h.b16 %v631
    %v744 = vunpack.c.l.b16 %v632
    %v745 = vpack.c.b16 %v682, %v673
    %v746 = vpack.c.b16 %v683, %v674
    %v747 = vpack.c.b16 %v684, %v675
    %v748 = vpack.c.b16 %v685, %v676
    %v749 = vpack.c.b16 %v686, %v677
    %v750 = vpack.c.b16 %v687, %v678
    %v751 = vpack.c.b16 %v688, %v679
    %v752 = vpack.c.b16 %v689, %v680
    %v753 = vpack.c.b16 %v690, %v681
    %v754 = vpack.c.b16 %v700, %v691
    %v755 = vpack.c.b16 %v701, %v692
    %v756 = vpack.c.b16 %v702, %v693
    %v757 = vpack.c.b16 %v703, %v694
    %v758 = vpack.c.b16 %v704, %v695
    %v759 = vpack.c.b16 %v705, %v696
    %v760 = vpack.c.b16 %v706, %v697
    %v761 = vpack.c.b16 %v707, %v698
    %v762 = vpack.c.b16 %v708, %v699
    %v763 = vpack.c.b16 %v718, %v709
    %v764 = vpack.c.b16 %v719, %v710
    %v765 = vpack.c.b16 %v720, %v711
    %v766 = vpack.c.b16 %v721, %v712
    %v767 = vpack.c.b16 %v722, %v713
    %v768 = vpack.c.b16 %v723, %v714
    %v769 = vpack.c.b16 %v724, %v715
    %v770 = vpack.c.b16 %v725, %v716
    %v771 = vpack.c.b16 %v726, %v717
    %v772 = vpack.c.b16 %v736, %v727
    %v773 = vpack.c.b16 %v737, %v728
    %v774 = vpack.c.b16 %v738, %v729
    %v775 = vpack.c.b16 %v739, %v730
    %v776 = vpack.c.b16 %v740, %v731
    %v777 = vpack.c.b16 %v741, %v732
    %v778 = vpack.c.b16 %v742, %v733
    %v779 = vpack.c.b16 %v743, %v734
    %v780 = vpack.c.b16 %v744, %v735
    %817 = vmatprep.subr.bf16.mxu0 0
    %818 = vmatpush1.bf16.msra.mxu0 %v97
    %819 = vmatprep.subr.bf16.mxu0 0
    %820 = vmatpush1.bf16.msra.mxu0 %v98
    %821 = vmatprep.subr.bf16.mxu0 0
    %822 = vmatpush1.bf16.msra.mxu0 %v99
    %823 = vmatprep.subr.bf16.mxu0 0
    %824 = vmatpush1.bf16.msra.mxu0 %v100
    %825 = vmatprep.subr.bf16.mxu0 0
    %826 = vmatpush1.bf16.msra.mxu0 %v101
    %827 = vmatprep.subr.bf16.mxu0 0
    %828 = vmatpush1.bf16.msra.mxu0 %v102
    %829 = vmatprep.subr.bf16.mxu0 0
    %830 = vmatpush1.bf16.msra.mxu0 %v103
    %831 = vmatprep.subr.bf16.mxu0 0
    %832 = vmatpush1.bf16.msra.mxu0 %v104
    %833 = vmatprep.subr.bf16.mxu0 0
    %834 = vmatpush1.bf16.msra.mxu0 %v158
    %835 = vmatprep.subr.bf16.mxu0 0
    %836 = vmatpush1.bf16.msra.mxu0 %v159
    %837 = vmatprep.subr.bf16.mxu0 0
    %838 = vmatpush1.bf16.msra.mxu0 %v160
    %839 = vmatprep.subr.bf16.mxu0 0
    %840 = vmatpush1.bf16.msra.mxu0 %v161
    %841 = vmatprep.subr.bf16.mxu0 0
    %842 = vmatpush1.bf16.msra.mxu0 %v162
    %843 = vmatprep.subr.bf16.mxu0 0
    %844 = vmatpush1.bf16.msra.mxu0 %v163
    %845 = vmatprep.subr.bf16.mxu0 0
    %846 = vmatpush1.bf16.msra.mxu0 %v164
    %847 = vmatprep.subr.bf16.mxu0 0
    %848 = vmatpush1.bf16.msra.mxu0 %v165
    %849 = vmatprep.mubr.bf16.mxu0 %v746
    %850 = vmatmul.mubr.bf16.gmra.mrb[0].mxu0 %v745
    %v851 = vpop.f32.mrb[0].mxu0
    %v852 = vadd.f32 0.0, %v851
    %v853 = vpop.f32.mrb[0].mxu0
    %v854 = vpop.f32.mrb[0].mxu0
    %v855 = vadd.f32 0.0, %v854
    %v856 = vpop.f32.mrb[0].mxu0
    %857 = vmatprep.mubr.bf16.mxu0 %v755
    %858 = vmatmul.mubr.bf16.gmra.mrb[0].mxu0 %v754
    %v859 = vpop.f32.mrb[0].mxu0
    %v860 = vadd.f32 0.0, %v859
    %v861 = vpop.f32.mrb[0].mxu0
    %v862 = vpop.f32.mrb[0].mxu0
    %v863 = vadd.f32 0.0, %v862
    %v864 = vpop.f32.mrb[0].mxu0
    %865 = vmatprep.mubr.bf16.mxu0 %v764
    %866 = vmatmul.mubr.bf16.gmra.mrb[0].mxu0 %v763
    %v867 = vpop.f32.mrb[0].mxu0
    %v868 = vadd.f32 0.0, %v867
    %v869 = vpop.f32.mrb[0].mxu0
    %v870 = vpop.f32.mrb[0].mxu0
    %v871 = vadd.f32 0.0, %v870
    %v872 = vpop.f32.mrb[0].mxu0
    %873 = vmatprep.mubr.bf16.mxu0 %v773
    %874 = vmatmul.mubr.bf16.gmra.mrb[0].mxu0 %v772
    %v875 = vpop.f32.mrb[0].mxu0
    %v876 = vadd.f32 0.0, %v875
    %v877 = vpop.f32.mrb[0].mxu0
    %v878 = vpop.f32.mrb[0].mxu0
    %v879 = vadd.f32 0.0, %v878
    %v880 = vpop.f32.mrb[0].mxu0
    %881 = vdwg.mxu0
    %882 = vmatprep.subr.bf16.mxu0 0
    %883 = vmatpush1.bf16.msra.mxu0 %v219
    %884 = vmatprep.subr.bf16.mxu0 0
    %885 = vmatpush1.bf16.msra.mxu0 %v220
    %886 = vmatprep.subr.bf16.mxu0 0
    %887 = vmatpush1.bf16.msra.mxu0 %v221
    %888 = vmatprep.subr.bf16.mxu0 0
    %889 = vmatpush1.bf16.msra.mxu0 %v222
    %890 = vmatprep.subr.bf16.mxu0 0
    %891 = vmatpush1.bf16.msra.mxu0 %v223
    %892 = vmatprep.subr.bf16.mxu0 0
    %893 = vmatpush1.bf16.msra.mxu0 %v224
    %894 = vmatprep.subr.bf16.mxu0 0
    %895 = vmatpush1.bf16.msra.mxu0 %v225
    %896 = vmatprep.subr.bf16.mxu0 0
    %897 = vmatpush1.bf16.msra.mxu0 %v226
    %898 = vmatprep.subr.bf16.mxu0 0
    %899 = vmatpush1.bf16.msra.mxu0 %v280
    %900 = vmatprep.subr.bf16.mxu0 0
    %901 = vmatpush1.bf16.msra.mxu0 %v281
    %902 = vmatprep.subr.bf16.mxu0 0
    %903 = vmatpush1.bf16.msra.mxu0 %v282
    %904 = vmatprep.subr.bf16.mxu0 0
    %905 = vmatpush1.bf16.msra.mxu0 %v283
    %906 = vmatprep.subr.bf16.mxu0 0
    %907 = vmatpush1.bf16.msra.mxu0 %v284
    %908 = vmatprep.subr.bf16.mxu0 0
    %909 = vmatpush1.bf16.msra.mxu0 %v285
    %910 = vmatprep.subr.bf16.mxu0 0
    %911 = vmatpush1.bf16.msra.mxu0 %v286
    %912 = vmatprep.subr.bf16.mxu0 0
    %913 = vmatpush1.bf16.msra.mxu0 %v287
    %914 = vmatprep.mubr.bf16.mxu0 %v748
    %915 = vmatmul.mubr.bf16.gmra.mrb[0].mxu0 %v747
    %v916 = vpop.f32.mrb[0].mxu0
    %v917 = vadd.f32 %v852, %v916
    %v918 = vpop.f32.mrb[0].mxu0
    %v919 = vpop.f32.mrb[0].mxu0
    %v920 = vadd.f32 %v855, %v919
    %v921 = vpop.f32.mrb[0].mxu0
    %922 = vmatprep.mubr.bf16.mxu0 %v757
    %923 = vmatmul.mubr.bf16.gmra.mrb[0].mxu0 %v756
    %v924 = vpop.f32.mrb[0].mxu0
    %v925 = vadd.f32 %v860, %v924
    %v926 = vpop.f32.mrb[0].mxu0
    %v927 = vpop.f32.mrb[0].mxu0
    %v928 = vadd.f32 %v863, %v927
    %v929 = vpop.f32.mrb[0].mxu0
    %930 = vmatprep.mubr.bf16.mxu0 %v766
    %931 = vmatmul.mubr.bf16.gmra.mrb[0].mxu0 %v765
    %v932 = vpop.f32.mrb[0].mxu0
    %v933 = vadd.f32 %v868, %v932
    %v934 = vpop.f32.mrb[0].mxu0
    %v935 = vpop.f32.mrb[0].mxu0
    %v936 = vadd.f32 %v871, %v935
    %v937 = vpop.f32.mrb[0].mxu0
    %938 = vmatprep.mubr.bf16.mxu0 %v775
    %939 = vmatmul.mubr.bf16.gmra.mrb[0].mxu0 %v774
    %v940 = vpop.f32.mrb[0].mxu0
    %v941 = vadd.f32 %v876, %v940
    %v942 = vpop.f32.mrb[0].mxu0
    %v943 = vpop.f32.mrb[0].mxu0
    %v944 = vadd.f32 %v879, %v943
    %v945 = vpop.f32.mrb[0].mxu0
    %946 = vdwg.mxu0
    %947 = vmatprep.subr.bf16.mxu0 0
    %948 = vmatpush1.bf16.msra.mxu0 %v341
    %949 = vmatprep.subr.bf16.mxu0 0
    %950 = vmatpush1.bf16.msra.mxu0 %v342
    %951 = vmatprep.subr.bf16.mxu0 0
    %952 = vmatpush1.bf16.msra.mxu0 %v343
    %953 = vmatprep.subr.bf16.mxu0 0
    %954 = vmatpush1.bf16.msra.mxu0 %v344
    %955 = vmatprep.subr.bf16.mxu0 0
    %956 = vmatpush1.bf16.msra.mxu0 %v345
    %957 = vmatprep.subr.bf16.mxu0 0
    %958 = vmatpush1.bf16.msra.mxu0 %v346
    %959 = vmatprep.subr.bf16.mxu0 0
    %960 = vmatpush1.bf16.msra.mxu0 %v347
    %961 = vmatprep.subr.bf16.mxu0 0
    %962 = vmatpush1.bf16.msra.mxu0 %v348
    %963 = vmatprep.subr.bf16.mxu0 0
    %964 = vmatpush1.bf16.msra.mxu0 %v402
    %965 = vmatprep.subr.bf16.mxu0 0
    %966 = vmatpush1.bf16.msra.mxu0 %v403
    %967 = vmatprep.subr.bf16.mxu0 0
    %968 = vmatpush1.bf16.msra.mxu0 %v404
    %969 = vmatprep.subr.bf16.mxu0 0
    %970 = vmatpush1.bf16.msra.mxu0 %v405
    %971 = vmatprep.subr.bf16.mxu0 0
    %972 = vmatpush1.bf16.msra.mxu0 %v406
    %973 = vmatprep.subr.bf16.mxu0 0
    %974 = vmatpush1.bf16.msra.mxu0 %v407
    %975 = vmatprep.subr.bf16.mxu0 0
    %976 = vmatpush1.bf16.msra.mxu0 %v408
    %977 = vmatprep.subr.bf16.mxu0 0
    %978 = vmatpush1.bf16.msra.mxu0 %v409
    %979 = vmatprep.mubr.bf16.mxu0 %v750
    %980 = vmatmul.mubr.bf16.gmra.mrb[0].mxu0 %v749
    %v981 = vpop.f32.mrb[0].mxu0
    %v982 = vadd.f32 %v917, %v981
    %v983 = vpop.f32.mrb[0].mxu0
    %v984 = vpop.f32.mrb[0].mxu0
    %v985 = vadd.f32 %v920, %v984
    %v986 = vpop.f32.mrb[0].mxu0
    %987 = vmatprep.mubr.bf16.mxu0 %v759
    %988 = vmatmul.mubr.bf16.gmra.mrb[0].mxu0 %v758
    %v989 = vpop.f32.mrb[0].mxu0
    %v990 = vadd.f32 %v925, %v989
    %v991 = vpop.f32.mrb[0].mxu0
    %v992 = vpop.f32.mrb[0].mxu0
    %v993 = vadd.f32 %v928, %v992
    %v994 = vpop.f32.mrb[0].mxu0
    %995 = vmatprep.mubr.bf16.mxu0 %v768
    %996 = vmatmul.mubr.bf16.gmra.mrb[0].mxu0 %v767
    %v997 = vpop.f32.mrb[0].mxu0
    %v998 = vadd.f32 %v933, %v997
    %v999 = vpop.f32.mrb[0].mxu0
    %v1000 = vpop.f32.mrb[0].mxu0
    %v1001 = vadd.f32 %v936, %v1000
    %v1002 = vpop.f32.mrb[0].mxu0
    %1003 = vmatprep.mubr.bf16.mxu0 %v777
    %1004 = vmatmul.mubr.bf16.gmra.mrb[0].mxu0 %v776
    %v1005 = vpop.f32.mrb[0].mxu0
    %v1006 = vadd.f32 %v941, %v1005
    %v1007 = vpop.f32.mrb[0].mxu0
    %v1008 = vpop.f32.mrb[0].mxu0
    %v1009 = vadd.f32 %v944, %v1008
    %v1010 = vpop.f32.mrb[0].mxu0
    %1011 = vdwg.mxu0
    %1012 = vmatprep.subr.bf16.mxu0 0
    %1013 = vmatpush1.bf16.msra.mxu0 %v463
    %1014 = vmatprep.subr.bf16.mxu0 0
    %1015 = vmatpush1.bf16.msra.mxu0 %v464
    %1016 = vmatprep.subr.bf16.mxu0 0
    %1017 = vmatpush1.bf16.msra.mxu0 %v465
    %1018 = vmatprep.subr.bf16.mxu0 0
    %1019 = vmatpush1.bf16.msra.mxu0 %v466
    %1020 = vmatprep.subr.bf16.mxu0 0
    %1021 = vmatpush1.bf16.msra.mxu0 %v467
    %1022 = vmatprep.subr.bf16.mxu0 0
    %1023 = vmatpush1.bf16.msra.mxu0 %v468
    %1024 = vmatprep.subr.bf16.mxu0 0
    %1025 = vmatpush1.bf16.msra.mxu0 %v469
    %1026 = vmatprep.subr.bf16.mxu0 0
    %1027 = vmatpush1.bf16.msra.mxu0 %v470
    %1028 = vmatprep.subr.bf16.mxu0 0
    %1029 = vmatpush1.bf16.msra.mxu0 %v524
    %1030 = vmatprep.subr.bf16.mxu0 0
    %1031 = vmatpush1.bf16.msra.mxu0 %v525
    %1032 = vmatprep.subr.bf16.mxu0 0
    %1033 = vmatpush1.bf16.msra.mxu0 %v526
    %1034 = vmatprep.subr.bf16.mxu0 0
    %1035 = vmatpush1.bf16.msra.mxu0 %v527
    %1036 = vmatprep.subr.bf16.mxu0 0
    %1037 = vmatpush1.bf16.msra.mxu0 %v528
    %1038 = vmatprep.subr.bf16.mxu0 0
    %1039 = vmatpush1.bf16.msra.mxu0 %v529
    %1040 = vmatprep.subr.bf16.mxu0 0
    %1041 = vmatpush1.bf16.msra.mxu0 %v530
    %1042 = vmatprep.subr.bf16.mxu0 0
    %1043 = vmatpush1.bf16.msra.mxu0 %v531
    %1044 = vmatprep.mubr.bf16.mxu0 %v752
    %1045 = vmatmul.mubr.bf16.gmra.mrb[0].mxu0 %v751
    %v1046 = vpop.f32.mrb[0].mxu0
    %v1047 = vadd.f32 %v982, %v1046
    %v1048 = vpop.f32.mrb[0].mxu0
    %v1049 = vpop.f32.mrb[0].mxu0
    %v1050 = vadd.f32 %v985, %v1049
    %v1051 = vpop.f32.mrb[0].mxu0
    %1052 = vmatprep.mubr.bf16.mxu0 %v761
    %1053 = vmatmul.mubr.bf16.gmra.mrb[0].mxu0 %v760
    %v1054 = vpop.f32.mrb[0].mxu0
    %v1055 = vadd.f32 %v990, %v1054
    %v1056 = vpop.f32.mrb[0].mxu0
    %v1057 = vpop.f32.mrb[0].mxu0
    %v1058 = vadd.f32 %v993, %v1057
    %v1059 = vpop.f32.mrb[0].mxu0
    %1060 = vmatprep.mubr.bf16.mxu0 %v770
    %1061 = vmatmul.mubr.bf16.gmra.mrb[0].mxu0 %v769
    %v1062 = vpop.f32.mrb[0].mxu0
    %v1063 = vadd.f32 %v998, %v1062
    %v1064 = vpop.f32.mrb[0].mxu0
    %v1065 = vpop.f32.mrb[0].mxu0
    %v1066 = vadd.f32 %v1001, %v1065
    %v1067 = vpop.f32.mrb[0].mxu0
    %1068 = vmatprep.mubr.bf16.mxu0 %v779
    %1069 = vmatmul.mubr.bf16.gmra.mrb[0].mxu0 %v778
    %v1070 = vpop.f32.mrb[0].mxu0
    %v1071 = vadd.f32 %v1006, %v1070
    %v1072 = vpop.f32.mrb[0].mxu0
    %v1073 = vpop.f32.mrb[0].mxu0
    %v1074 = vadd.f32 %v1009, %v1073
    %v1075 = vpop.f32.mrb[0].mxu0
    %1076 = vdwg.mxu0
    %1077 = vmatprep.subr.bf16.mxu0 0
    %1078 = vmatpush1.bf16.msra.mxu0 %v585
    %1079 = vmatprep.subr.bf16.mxu0 0
    %1080 = vmatpush1.bf16.msra.mxu0 %v586
    %1081 = vmatprep.subr.bf16.mxu0 0
    %1082 = vmatpush1.bf16.msra.mxu0 %v587
    %1083 = vmatprep.subr.bf16.mxu0 0
    %1084 = vmatpush1.bf16.msra.mxu0 %v588
    %1085 = vmatprep.subr.bf16.mxu0 0
    %1086 = vmatpush1.bf16.msra.mxu0 %v589
    %1087 = vmatprep.subr.bf16.mxu0 0
    %1088 = vmatpush1.bf16.msra.mxu0 %v590
    %1089 = vmatprep.subr.bf16.mxu0 0
    %1090 = vmatpush1.bf16.msra.mxu0 %v591
    %1091 = vmatprep.subr.bf16.mxu0 0
    %1092 = vmatpush1.bf16.msra.mxu0 %v592
    %1093 = vmatprep.subr.bf16.mxu0 0
    %1094 = vmatpush1.bf16.msra.mxu0 0
    %1095 = vmatprep.subr.bf16.mxu0 0
    %1096 = vmatpush1.bf16.msra.mxu0 0
    %1097 = vmatprep.subr.bf16.mxu0 0
    %1098 = vmatpush1.bf16.msra.mxu0 0
    %1099 = vmatprep.subr.bf16.mxu0 0
    %1100 = vmatpush1.bf16.msra.mxu0 0
    %1101 = vmatprep.subr.bf16.mxu0 0
    %1102 = vmatpush1.bf16.msra.mxu0 0
    %1103 = vmatprep.subr.bf16.mxu0 0
    %1104 = vmatpush1.bf16.msra.mxu0 0
    %1105 = vmatprep.subr.bf16.mxu0 0
    %1106 = vmatpush1.bf16.msra.mxu0 0
    %1107 = vmatprep.subr.bf16.mxu0 0
    %1108 = vmatpush1.bf16.msra.mxu0 0
    %1109 = vmatprep.mubr.bf16.mxu0 0
    %1110 = vmatmul.mubr.bf16.gmra.mrb[0].mxu0 %v753
    %v1111 = vpop.f32.mrb[0].mxu0
    %v1112 = vadd.f32 %v1047, %v1111
    %v1113 = vpop.f32.mrb[0].mxu0
    %v1114 = vpop.f32.mrb[0].mxu0
    %v1115 = vadd.f32 %v1050, %v1114
    %v1116 = vpop.f32.mrb[0].mxu0
    %1117 = vmatprep.mubr.bf16.mxu0 0
    %1118 = vmatmul.mubr.bf16.gmra.mrb[0].mxu0 %v762
    %v1119 = vpop.f32.mrb[0].mxu0
    %v1120 = vadd.f32 %v1055, %v1119
    %v1121 = vpop.f32.mrb[0].mxu0
    %v1122 = vpop.f32.mrb[0].mxu0
    %v1123 = vadd.f32 %v1058, %v1122
    %v1124 = vpop.f32.mrb[0].mxu0
    %1125 = vmatprep.mubr.bf16.mxu0 0
    %1126 = vmatmul.mubr.bf16.gmra.mrb[0].mxu0 %v771
    %v1127 = vpop.f32.mrb[0].mxu0
    %v1128 = vadd.f32 %v1063, %v1127
    %v1129 = vpop.f32.mrb[0].mxu0
    %v1130 = vpop.f32.mrb[0].mxu0
    %v1131 = vadd.f32 %v1066, %v1130
    %v1132 = vpop.f32.mrb[0].mxu0
    %1133 = vmatprep.mubr.bf16.mxu0 0
    %1134 = vmatmul.mubr.bf16.gmra.mrb[0].mxu0 %v780
    %v1135 = vpop.f32.mrb[0].mxu0
    %v1136 = vadd.f32 %v1071, %v1135
    %v1137 = vpop.f32.mrb[0].mxu0
    %v1138 = vpop.f32.mrb[0].mxu0
    %v1139 = vadd.f32 %v1074, %v1138
    %v1140 = vpop.f32.mrb[0].mxu0
    %1141 = vdwg.mxu0
    %v1142 = vadd.f32 %v1112, %v1128
    %v1143 = vadd.f32 %v1115, %v1131
    %v1144 = vadd.f32 %v1120, %v1136
    %v1145 = vadd.f32 %v1123, %v1139
    %1146 = vxpose.xlu0.b32.start [1/16] %v1142, 128
    %1147 = vxpose.xlu0.b32.cont [2/16] %v1143, 128
    %1148 = vxpose.xlu0.b32.cont [3/16] %v1144, 128
    %1149 = vxpose.xlu0.b32.cont [4/16] %v1145, 128
    %1150 = vxpose.xlu0.b32.cont [5/16] 0.0, 128
    %1151 = vxpose.xlu0.b32.cont [6/16] 0.0, 128
    %1152 = vxpose.xlu0.b32.cont [7/16] 0.0, 128
    %1153 = vxpose.xlu0.b32.cont [8/16] 0.0, 128
    %1154 = vxpose.xlu0.b32.cont [9/16] 0.0, 128
    %1155 = vxpose.xlu0.b32.cont [10/16] 0.0, 128
    %1156 = vxpose.xlu0.b32.cont [11/16] 0.0, 128
    %1157 = vxpose.xlu0.b32.cont [12/16] 0.0, 128
    %1158 = vxpose.xlu0.b32.cont [13/16] 0.0, 128
    %1159 = vxpose.xlu0.b32.cont [14/16] 0.0, 128
    %1160 = vxpose.xlu0.b32.cont [15/16] 0.0, 128
    %1161 = vxpose.xlu0.b32.end [16/16] 0.0, 128
    %v1162 = vpop.trf.xlu0
    %v1163 = vpop.trf.xlu0
    %v1164 = vpop.trf.xlu0
    %v1165 = vpop.trf.xlu0
    %v1166 = vpop.trf.xlu0
    %v1167 = vpop.trf.xlu0
    %v1168 = vpop.trf.xlu0
    %v1169 = vpop.trf.xlu0
    %v1170 = vpop.trf.xlu0
    %v1171 = vpop.trf.xlu0
    %v1172 = vpop.trf.xlu0
    %v1173 = vpop.trf.xlu0
    %v1174 = vpop.trf.xlu0
    %v1175 = vpop.trf.xlu0
    %v1176 = vpop.trf.xlu0
    %v1177 = vpop.trf.xlu0
    %vm1178 = vcmask 261120
    %1179 = vst.msk [vmem:[#allocation5] sm:$0xff] %vm1178, %v1162
    %1180 = vst.msk [vmem:[#allocation5 + $0x8] sm:$0xff] %vm1178, %v1163
    %1181 = vst.msk [vmem:[#allocation5 + $0x10] sm:$0xff] %vm1178, %v1164
    %1182 = vst.msk [vmem:[#allocation5 + $0x18] sm:$0xff] %vm1178, %v1165
    %1183 = vst.msk [vmem:[#allocation5 + $0x20] sm:$0xff] %vm1178, %v1166
    %1184 = vst.msk [vmem:[#allocation5 + $0x28] sm:$0xff] %vm1178, %v1167
    %1185 = vst.msk [vmem:[#allocation5 + $0x30] sm:$0xff] %vm1178, %v1168
    %1186 = vst.msk [vmem:[#allocation5 + $0x38] sm:$0xff] %vm1178, %v1169
    %1187 = vst.msk [vmem:[#allocation5 + $0x40] sm:$0xff] %vm1178, %v1170
    %1188 = vst.msk [vmem:[#allocation5 + $0x48] sm:$0xff] %vm1178, %v1171
    %1189 = vst.msk [vmem:[#allocation5 + $0x50] sm:$0xff] %vm1178, %v1172
    %1190 = vst.msk [vmem:[#allocation5 + $0x58] sm:$0xff] %vm1178, %v1173
    %1191 = vst.msk [vmem:[#allocation5 + $0x60] sm:$0xff] %vm1178, %v1174
    %1192 = vst.msk [vmem:[#allocation5 + $0x68] sm:$0xff] %vm1178, %v1175
    %1193 = vst.msk [vmem:[#allocation5 + $0x70] sm:$0xff] %vm1178, %v1176
    %1194 = vst.msk [vmem:[#allocation5 + $0x78] sm:$0xff] %vm1178, %v1177
    // Predicated region
    $region14: #{tpu_custom_call.1} parent=1 // pred_check
      _
    $region15: #{tpu_custom_call.1} parent=1 // pred_check_branch
      %1196 = sbr.rel (0) target = $region17
    $region16: #{tpu_custom_call.1} parent=1 // pred_region
      %s1198 = ssub.s32 2048, 128
      %1199 = vsyncadd [#allocation4], %s1198
      %s1200 = sshll.u32 [#allocation5], 4
      %s1201 = int_to_ptr.vmem [resolvable:$true] %s1200
      %1206 = dma.vmem_to_hbm [thread:$0]  %s1201, 128, %s2, [#allocation4], 128, 128, 8
    $region17: #{tpu_custom_call.1} parent=1 // pred_fallthru
      _
    // Predicated region
    $region18: #{tpu_custom_call.1} parent=1 // pred_check
      _
    $region19: #{tpu_custom_call.1} parent=1 // pred_check_branch
      %1208 = sbr.rel (0) target = $region21
    $region20: #{tpu_custom_call.1} parent=1 // pred_region
      %1209 = dma.done [#allocation4], 2048
    $region21: #{tpu_custom_call.1} parent=1 // pred_fallthru
      _
    %1210 = vsyncpa [#allocation3], 1
    %1211 = vsyncpa [#allocation4], 1

</llo_original>
